<compile_context>
chip_gen: v7x
topology: tpu7x:2x2x1
jax: 0.10.0
libtpu: 0.0.40
codegen_flags: <defaults>
</compile_context>

<pallas_src>
import functools

import numpy as np
import jax
import jax.numpy as jnp
from jax.experimental import pallas as pl
from jax.experimental.pallas import tpu as pltpu

LANE = 128       # vreg lane width; every slab segment is padded to this
BIAS_ROWS = 8    # sublane-aligned rows reserved per bias segment


def _round_up(n, m):
    return ((n + m - 1) // m) * m


# ----------------------------------------------------------------------------
# Fused kernel: gather (one-hot matmul) -> Linear -> Mish -> Linear
# ----------------------------------------------------------------------------
def _time_embed_kernel(t_pad, step_ref, slab_ref, o_ref):
    tb = step_ref.shape[0]

    # ---- carve the packed parameter slab (static, sublane-aligned offsets)
    o_w1 = t_pad                      # table rows: [0, t_pad)
    o_b1 = o_w1 + LANE                # W1^T rows:  [t_pad, t_pad+128)
    o_w2 = o_b1 + BIAS_ROWS           # b1 rows:    8 reserved, row 0 valid
    o_b2 = o_w2 + LANE                # W2^T rows:  128

    table = slab_ref[pl.ds(0, t_pad), :]        # (T_pad, 128) sinusoid table
    w1    = slab_ref[pl.ds(o_w1, LANE), :]      # (128, 128)   zero-padded W1^T
    b1    = slab_ref[pl.ds(o_b1, 1), :]         # (1, 128)
    w2    = slab_ref[pl.ds(o_w2, LANE), :]      # (128, 128)   zero-padded W2^T
    b2    = slab_ref[pl.ds(o_b2, 1), :]         # (1, 128)

    # ---- gather: x = table[diffusion_step]  (one-hot row-select on MXU)
    steps = step_ref[...]                                            # (TB, 1) int32
    iota = jax.lax.broadcasted_iota(jnp.int32, (tb, t_pad), 1)       # (TB, T_pad)
    onehot = (iota == steps).astype(jnp.float32)                     # exact 0/1
    x = jnp.dot(onehot, table, preferred_element_type=jnp.float32)   # (TB, 128)

    # ---- Linear 1 + Mish (single exp):
    #   tanh(softplus(h)) = e*(e+2) / (e*(e+2)+2), e = exp(h); Mish(h)=h for h>20.
    h = jnp.dot(x, w1, preferred_element_type=jnp.float32) + b1
    e = jnp.exp(jnp.minimum(h, 20.0))
    num = e * (e + 2.0)
    t = num / (num + 2.0)
    h = jnp.where(h > 20.0, h, h * t)

    # ---- Linear 2 (lane-dense 128-wide output, sliced to proj_dim outside)
    out = jnp.dot(h, w2, preferred_element_type=jnp.float32) + b2
    o_ref[...] = out.astype(o_ref.dtype)


def time_embedding_pallas(diffusion_step, slab, t_pad, proj_dim, *,
                          max_block_b=2048):
    """Full TimeEmbedding forward in one pallas_call.

    diffusion_step: (B,) int
    slab:           packed, padded params from prepare_params()
    """
    B = diffusion_step.shape[0]
    rows = slab.shape[0]

    # Biggest tile that fits comfortably (working set is tiny vs. 64 MiB VMEM).
    tb = min(_round_up(B, 8), max_block_b)
    # v7x: when B is large, force >= 2 grid steps so the "parallel" batch axis
    # actually shards across both TensorCores.  No retiling needed for the
    # smaller 64 MiB VMEM -- everything here is single-digit MiB at most.
    if B >= 1024 and pl.cdiv(B, tb) < 2:
        tb = _round_up(pl.cdiv(B, 2), 8)
    nb = pl.cdiv(B, tb)

    steps2d = diffusion_step.astype(jnp.int32).reshape(B, 1)

    grid_spec = pltpu.PrefetchScalarGridSpec(
        num_scalar_prefetch=0,
        grid=(nb,),
        in_specs=[
            pl.BlockSpec((tb, 1), lambda i: (i, 0)),        # steps (tiled)
            pl.BlockSpec((rows, LANE), lambda i: (0, 0)),   # packed params (resident)
        ],
        out_specs=pl.BlockSpec((tb, LANE), lambda i: (i, 0)),
    )

    out_padded = pl.pallas_call(
        functools.partial(_time_embed_kernel, t_pad),
        out_shape=jax.ShapeDtypeStruct((B, LANE), jnp.float32),
        grid_spec=grid_spec,
        compiler_params=pltpu.CompilerParams(
            dimension_semantics=("parallel",)),   # batch sharding on v7x (2 TCs)
    )(steps2d, slab)

    return out_padded[:, :proj_dim]


# ----------------------------------------------------------------------------
# Module-equivalent setup
# ----------------------------------------------------------------------------
def build_embedding(dim, max_steps):
    # Mirrors TimeEmbedding._build_embedding
    steps = jnp.arange(max_steps, dtype=jnp.float32)[:, None]          # (T, 1)
    dims = jnp.arange(dim, dtype=jnp.float32)[None, :]                 # (1, dim)
    table = steps * 10.0 ** (dims * 4.0 / dim)                         # (T, dim)
    return jnp.concatenate([jnp.sin(table), jnp.cos(table)], axis=1)   # (T, 2*dim)


def init_params(key, dim, proj_dim):
    # Deterministic synthetic init matching nn.Linear shapes:
    #   Linear(dim*2, proj_dim*2):    W1 (proj_dim*2, dim*2), b1 (proj_dim*2,)
    #   Linear(proj_dim*2, proj_dim): W2 (proj_dim, proj_dim*2), b2 (proj_dim,)
    k1, k2, k3, k4 = jax.random.split(key, 4)
    in1, out1 = dim * 2, proj_dim * 2
    in2, out2 = proj_dim * 2, proj_dim
    bound1 = 1.0 / np.sqrt(in1)
    bound2 = 1.0 / np.sqrt(in2)
    w1 = jax.random.uniform(k1, (out1, in1), jnp.float32, -bound1, bound1)
    b1 = jax.random.uniform(k2, (out1,), jnp.float32, -bound1, bound1)
    w2 = jax.random.uniform(k3, (out2, in2), jnp.float32, -bound2, bound2)
    b2 = jax.random.uniform(k4, (out2,), jnp.float32, -bound2, bound2)
    return w1, b1, w2, b2


def prepare_params(embedding, w1, b1, w2, b2):
    """Done ONCE off the hot path: pack table + transposed/zero-padded weights
    and biases into a single (rows, 128) f32 slab (all segments (8,128)-aligned)."""
    max_steps, emb_dim = embedding.shape            # (T, 2*dim)
    hid = w1.shape[0]                               # 2*proj
    proj = w2.shape[0]                              # proj
    assert emb_dim <= LANE and hid <= LANE and proj <= LANE

    t_pad = _round_up(max_steps, 8)

    tab_seg = jnp.zeros((t_pad, LANE), jnp.float32).at[:max_steps, :emb_dim].set(embedding)
    w1_seg = jnp.zeros((LANE, LANE), jnp.float32).at[:emb_dim, :hid].set(w1.T)
    b1_seg = jnp.zeros((BIAS_ROWS, LANE), jnp.float32).at[0, :hid].set(b1)
    w2_seg = jnp.zeros((LANE, LANE), jnp.float32).at[:hid, :proj].set(w2.T)
    b2_seg = jnp.zeros((BIAS_ROWS, LANE), jnp.float32).at[0, :proj].set(b2)

    slab = jnp.concatenate([tab_seg, w1_seg, b1_seg, w2_seg, b2_seg], axis=0)
    return slab, t_pad, proj


def reference_forward(diffusion_step, embedding, w1, b1, w2, b2):
    x = embedding[diffusion_step]
    h = x @ w1.T + b1
    h = h * jnp.tanh(jax.nn.softplus(h))                # Mish
    return h @ w2.T + b2


if __name__ == "__main__":
    dim, proj_dim, max_steps = 16, 32, 50
    batch = 8

    key = jax.random.PRNGKey(0)
    k_params, k_steps = jax.random.split(key)

    embedding = build_embedding(dim, max_steps)                       # (50, 32)
    w1, b1, w2, b2 = init_params(k_params, dim, proj_dim)
    slab, t_pad, proj = prepare_params(embedding, w1, b1, w2, b2)     # once, off hot path
    diffusion_step = jax.random.randint(k_steps, (batch,), 0, max_steps)

    out = time_embedding_pallas(diffusion_step, slab, t_pad, proj)
    out = jax.block_until_ready(out)

    ref = reference_forward(diffusion_step, embedding, w1, b1, w2, b2)
    np.testing.assert_allclose(np.asarray(out), np.asarray(ref), rtol=1e-4, atol=1e-4)

    assert out.shape == (batch, proj_dim)
    print("KERNEL_OK")
</pallas_src>

<mosaic_0001>
module attributes {stable_mosaic.version = 11 : i64} {
  func.func @_time_embed_kernel(%arg0: i32, %arg1: memref<8x1xi32, #tpu.memory_space<vmem>>, %arg2: memref<328x128xf32, #tpu.memory_space<vmem>>, %arg3: memref<8x128xf32, #tpu.memory_space<vmem>>) attributes {dimension_semantics = [#tpu.dimension_semantics<parallel>], iteration_bounds = array<i64: 1>, scalar_prefetch = 0 : i64, scratch_operands = 0 : i64, tpu.core_type = #tpu.core_type<tc>, window_params = [{transform_indices = @transform_0, window_bounds = array<i64: 8, 1>}, {pipeline_mode = #tpu.pipeline_mode<synchronous>, transform_indices = @transform_1, window_bounds = array<i64: 328, 128>}, {transform_indices = @transform_2, window_bounds = array<i64: 8, 128>}]} {
    %c0 = arith.constant 0 : index
    %c0_0 = arith.constant 0 : index
    %0 = vector.load %arg2[%c0, %c0_0] : memref<328x128xf32, #tpu.memory_space<vmem>>, vector<56x128xf32>
    %c56 = arith.constant 56 : index
    %c0_1 = arith.constant 0 : index
    %1 = vector.load %arg2[%c56, %c0_1] : memref<328x128xf32, #tpu.memory_space<vmem>>, vector<128x128xf32>
    %c184 = arith.constant 184 : index
    %c0_2 = arith.constant 0 : index
    %2 = vector.load %arg2[%c184, %c0_2] : memref<328x128xf32, #tpu.memory_space<vmem>>, vector<1x128xf32>
    %c192 = arith.constant 192 : index
    %c0_3 = arith.constant 0 : index
    %3 = vector.load %arg2[%c192, %c0_3] : memref<328x128xf32, #tpu.memory_space<vmem>>, vector<128x128xf32>
    %c320 = arith.constant 320 : index
    %c0_4 = arith.constant 0 : index
    %4 = vector.load %arg2[%c320, %c0_4] : memref<328x128xf32, #tpu.memory_space<vmem>>, vector<1x128xf32>
    %c0_5 = arith.constant 0 : index
    %c0_6 = arith.constant 0 : index
    %5 = vector.load %arg1[%c0_5, %c0_6] : memref<8x1xi32, #tpu.memory_space<vmem>>, vector<8x1xi32>
    %6 = tpu.iota {dimensions = array<i32: 1>} : vector<8x56xi32>
    %7 = vector.broadcast %5 : vector<8x1xi32> to vector<8x56xi32>
    %8 = arith.cmpi eq, %6, %7 : vector<8x56xi32>
    %9 = arith.extui %8 : vector<8x56xi1> to vector<8x56xi32>
    %10 = arith.sitofp %9 : vector<8x56xi32> to vector<8x56xf32>
    %cst = arith.constant dense<0.000000e+00> : vector<8x128xf32>
    %11 = tpu.matmul %10, %0, %cst {dimension_numbers = #tpu.dot_dimension_numbers<[1], [0], [0], [1], [0, 0, 1, 1], [], []>} : vector<8x56xf32>, vector<56x128xf32>, vector<8x128xf32> -> vector<8x128xf32>
    %cst_7 = arith.constant dense<0.000000e+00> : vector<8x128xf32>
    %12 = tpu.matmul %11, %1, %cst_7 {dimension_numbers = #tpu.dot_dimension_numbers<[1], [0], [0], [1], [0, 0, 1, 1], [], []>} : vector<8x128xf32>, vector<128x128xf32>, vector<8x128xf32> -> vector<8x128xf32>
    %13 = vector.broadcast %2 : vector<1x128xf32> to vector<8x128xf32>
    %14 = arith.addf %12, %13 : vector<8x128xf32>
    %cst_8 = arith.constant 2.000000e+01 : f32
    %15 = vector.broadcast %cst_8 : f32 to vector<8x128xf32>
    %16 = arith.minimumf %14, %15 : vector<8x128xf32>
    %17 = math.exp %16 : vector<8x128xf32>
    %cst_9 = arith.constant 2.000000e+00 : f32
    %18 = vector.broadcast %cst_9 : f32 to vector<8x128xf32>
    %19 = arith.addf %17, %18 : vector<8x128xf32>
    %20 = arith.mulf %17, %19 : vector<8x128xf32>
    %cst_10 = arith.constant 2.000000e+00 : f32
    %21 = vector.broadcast %cst_10 : f32 to vector<8x128xf32>
    %22 = arith.addf %20, %21 : vector<8x128xf32>
    %23 = arith.divf %20, %22 : vector<8x128xf32>
    %cst_11 = arith.constant 2.000000e+01 : f32
    %24 = vector.broadcast %cst_11 : f32 to vector<8x128xf32>
    %25 = arith.cmpf ogt, %14, %24 : vector<8x128xf32>
    %26 = arith.mulf %14, %23 : vector<8x128xf32>
    %27 = arith.select %25, %14, %26 : vector<8x128xi1>, vector<8x128xf32>
    %cst_12 = arith.constant dense<0.000000e+00> : vector<8x128xf32>
    %28 = tpu.matmul %27, %3, %cst_12 {dimension_numbers = #tpu.dot_dimension_numbers<[1], [0], [0], [1], [0, 0, 1, 1], [], []>} : vector<8x128xf32>, vector<128x128xf32>, vector<8x128xf32> -> vector<8x128xf32>
    %29 = vector.broadcast %4 : vector<1x128xf32> to vector<8x128xf32>
    %30 = arith.addf %28, %29 : vector<8x128xf32>
    %c0_13 = arith.constant 0 : index
    %c0_14 = arith.constant 0 : index
    %31 = vector.load %arg3[%c0_13, %c0_14] : memref<8x128xf32, #tpu.memory_space<vmem>>, vector<8x128xf32>
    tpu.vector_store %arg3[%c0_13, %c0_14], %30 {strides = array<i32>} : memref<8x128xf32, #tpu.memory_space<vmem>>, vector<8x128xf32>,
    return
  }
  func.func @transform_0(%arg0: i32) -> (i32, i32) {
    %c0_i32 = arith.constant 0 : i32
    %c0_i32_0 = arith.constant 0 : i32
    return %arg0, %c0_i32 : i32, i32
  }
  func.func @transform_1(%arg0: i32) -> (i32, i32) {
    %c0_i32 = arith.constant 0 : i32
    %c0_i32_0 = arith.constant 0 : i32
    %c0_i32_1 = arith.constant 0 : i32
    return %c0_i32, %c0_i32_0 : i32, i32
  }
  func.func @transform_2(%arg0: i32) -> (i32, i32) {
    %c0_i32 = arith.constant 0 : i32
    %c0_i32_0 = arith.constant 0 : i32
    return %arg0, %c0_i32 : i32, i32
  }
}

</mosaic_0001>

<llo_original>
// kernel: tpu_custom_call.1
$region0: #{tpu_custom_call.1}
  #allocation0 [shape = 'u32[]', space=smem, size = 0x4, offset = 0x4, fixed_abs, tag = 'smem constant byte address 0x4 - core index']
  #allocation1 [shape = 'u32[144,128]{1,0:T(1,128)}', space=vmem, size = 0x12000, scoped, tag = 'internal scratch']
  %s0 = inlined_call_operand.vmem [shape: s32[8,1], index: 0, kind: input, shape index: {}]
  %s1 = inlined_call_operand.hbm [shape: f32[328,128], index: 1, kind: input, shape index: {}]
  %s2 = inlined_call_operand.hbm [shape: f32[8,128], index: 2, kind: output, shape index: {}]
  %s3 = sld [smem:[#allocation0]]
  $region22: #{tpu_custom_call.1} parent=0
    _
  %s5 = ssub.s32 1, %s3
  %s6 = scalar_select 0, %s5, %s3
  $region1: #{tpu_custom_call.1} parent=0
    #allocation2 [shape = 'u8[167936]{0}', space=vmem, size = 0x29000, scoped, tag = 'input window, operand 1, single buffered']
    #allocation3 [shape = 's32[1]{0}', space=sflag, size = 0x4, scoped, tag = 'scoped memory for tpu_custom_call.1']
    #allocation4 [shape = 's32[1]{0}', space=sflag, size = 0x4, scoped, tag = 'scoped memory for tpu_custom_call.1']
    #allocation5 [shape = 'u8[4096]{0}', space=vmem, size = 0x1000, scoped, tag = 'output window, operand 0, single buffered']
    %7 = vsyncpa [#allocation3], 0
    %8 = vsyncpa [#allocation4], 0
    // Predicated region
    $region2: #{tpu_custom_call.1} parent=1 // pred_check
      _
    $region3: #{tpu_custom_call.1} parent=1 // pred_check_branch
      %10 = sbr.rel (0) target = $region5
    $region4: #{tpu_custom_call.1} parent=1 // pred_region
      _
    $region5: #{tpu_custom_call.1} parent=1 // pred_fallthru
      _
    // Predicated region
    $region6: #{tpu_custom_call.1} parent=1 // pred_check
      _
    $region7: #{tpu_custom_call.1} parent=1 // pred_check_branch
      %12 = sbr.rel (0) target = $region9
    $region8: #{tpu_custom_call.1} parent=1 // pred_region
      %s14 = ssub.s32 5248, 5248
      %15 = vsyncadd [#allocation3], %s14
      %s16 = sshll.u32 [#allocation2], 4
      %s17 = int_to_ptr.vmem [resolvable:$true] %s16
      %22 = dma.hbm_to_vmem [thread:$0]  %s1, 5248, %s17, [#allocation3], 128, 128, 8
    $region9: #{tpu_custom_call.1} parent=1 // pred_fallthru
      _
    // Predicated region
    $region10: #{tpu_custom_call.1} parent=1 // pred_check
      _
    $region11: #{tpu_custom_call.1} parent=1 // pred_check_branch
      %24 = sbr.rel (0) target = $region13
    $region12: #{tpu_custom_call.1} parent=1 // pred_region
      %25 = dma.done [#allocation3], 5248
    $region13: #{tpu_custom_call.1} parent=1 // pred_fallthru
      _
    %v26 = vld [vmem:[#allocation2] sm:$0xff]
    %v27 = vld [vmem:[#allocation2 + $0x8] sm:$0xff]
    %v28 = vld [vmem:[#allocation2 + $0x10] sm:$0xff]
    %v29 = vld [vmem:[#allocation2 + $0x18] sm:$0xff]
    %v30 = vld [vmem:[#allocation2 + $0x20] sm:$0xff]
    %v31 = vld [vmem:[#allocation2 + $0x28] sm:$0xff]
    %v32 = vld [vmem:[#allocation2 + $0x30] sm:$0xff]
    %v33 = vld [vmem:[#allocation2 + $0x38] sm:$0xff]
    %v34 = vld [vmem:[#allocation2 + $0x40] sm:$0xff]
    %v35 = vld [vmem:[#allocation2 + $0x48] sm:$0xff]
    %v36 = vld [vmem:[#allocation2 + $0x50] sm:$0xff]
    %v37 = vld [vmem:[#allocation2 + $0x58] sm:$0xff]
    %v38 = vld [vmem:[#allocation2 + $0x60] sm:$0xff]
    %v39 = vld [vmem:[#allocation2 + $0x68] sm:$0xff]
    %v40 = vld [vmem:[#allocation2 + $0x70] sm:$0xff]
    %v41 = vld [vmem:[#allocation2 + $0x78] sm:$0xff]
    %v42 = vld [vmem:[#allocation2 + $0x80] sm:$0xff]
    %v43 = vld [vmem:[#allocation2 + $0x88] sm:$0xff]
    %v44 = vld [vmem:[#allocation2 + $0x90] sm:$0xff]
    %v45 = vld [vmem:[#allocation2 + $0x98] sm:$0xff]
    %v46 = vld [vmem:[#allocation2 + $0xa0] sm:$0xff]
    %v47 = vld [vmem:[#allocation2 + $0xa8] sm:$0xff]
    %v48 = vld [vmem:[#allocation2 + $0xb0] sm:$0xff]
    %v49 = vld [vmem:[#allocation2 + $0xb8] sm:$0x1]
    %v50 = vld [vmem:[#allocation2 + $0xc0] sm:$0xff]
    %v51 = vld [vmem:[#allocation2 + $0xc8] sm:$0xff]
    %v52 = vld [vmem:[#allocation2 + $0xd0] sm:$0xff]
    %v53 = vld [vmem:[#allocation2 + $0xd8] sm:$0xff]
    %v54 = vld [vmem:[#allocation2 + $0xe0] sm:$0xff]
    %v55 = vld [vmem:[#allocation2 + $0xe8] sm:$0xff]
    %v56 = vld [vmem:[#allocation2 + $0xf0] sm:$0xff]
    %v57 = vld [vmem:[#allocation2 + $0xf8] sm:$0xff]
    %v58 = vld [vmem:[#allocation2 + $0x100] sm:$0xff]
    %v59 = vld [vmem:[#allocation2 + $0x108] sm:$0xff]
    %v60 = vld [vmem:[#allocation2 + $0x110] sm:$0xff]
    %v61 = vld [vmem:[#allocation2 + $0x118] sm:$0xff]
    %v62 = vld [vmem:[#allocation2 + $0x120] sm:$0xff]
    %v63 = vld [vmem:[#allocation2 + $0x128] sm:$0xff]
    %v64 = vld [vmem:[#allocation2 + $0x130] sm:$0xff]
    %v65 = vld [vmem:[#allocation2 + $0x138] sm:$0xff]
    %v66 = vld [vmem:[#allocation2 + $0x140] sm:$0x1]
    %v67 = vld [vmem:[%s0] sm:$0xff]
    %v68 = vlaneseq
    %v69 = vand.u32 %v68, 127
    %70 = vset.pattern.permute.xlu0 0
    %71 = vperm.xlu0 %70, %v67
    %v72 = vpop.permute.xlu0 %71
    %vm73 = vcmp.eq.s32.totalorder %v69, %v72
    %v74 = vsel %vm73, 1, 0
    %v75 = vcvt.s32.f32 %v74
    %vm76 = vcmask 457728
    %v78 = vsel %vm76, %v75, 0
    %80 = vmatprep.subr.mxu0 0.0
    %81 = vmatpush1.msra.mxu0 %v26
    %82 = vmatprep.subr.mxu0 0.0
    %83 = vmatpush1.msra.mxu0 %v27
    %84 = vmatprep.subr.mxu0 0.0
    %85 = vmatpush1.msra.mxu0 %v28
    %86 = vmatprep.subr.mxu0 0.0
    %87 = vmatpush1.msra.mxu0 %v29
    %88 = vmatprep.subr.mxu0 0.0
    %89 = vmatpush1.msra.mxu0 %v30
    %90 = vmatprep.subr.mxu0 0.0
    %91 = vmatpush1.msra.mxu0 %v31
    %92 = vmatprep.subr.mxu0 0.0
    %93 = vmatpush1.msra.mxu0 %v32
    %94 = vmatprep.subr.mxu0 0.0
    %95 = vmatpush1.msra.mxu0 0.0
    %96 = vmatprep.subr.mxu0 0.0
    %97 = vmatpush1.msra.mxu0 0.0
    %98 = vmatprep.subr.mxu0 0.0
    %99 = vmatpush1.msra.mxu0 0.0
    %100 = vmatprep.subr.mxu0 0.0
    %101 = vmatpush1.msra.mxu0 0.0
    %102 = vmatprep.subr.mxu0 0.0
    %103 = vmatpush1.msra.mxu0 0.0
    %104 = vmatprep.subr.mxu0 0.0
    %105 = vmatpush1.msra.mxu0 0.0
    %106 = vmatprep.subr.mxu0 0.0
    %107 = vmatpush1.msra.mxu0 0.0
    %108 = vmatprep.subr.mxu0 0.0
    %109 = vmatpush1.msra.mxu0 0.0
    %110 = vmatprep.subr.mxu0 0.0
    %111 = vmatpush1.msra.mxu0 0.0
    %112 = vmatprep.subr.mxu0 0.0
    %113 = vmatpush1.msra.mxu0 0.0
    %114 = vmatprep.subr.mxu0 0.0
    %115 = vmatpush1.msra.mxu0 0.0
    %116 = vmatprep.subr.mxu0 0.0
    %117 = vmatpush1.msra.mxu0 0.0
    %118 = vmatprep.subr.mxu0 0.0
    %119 = vmatpush1.msra.mxu0 0.0
    %120 = vmatprep.subr.mxu0 0.0
    %121 = vmatpush1.msra.mxu0 0.0
    %122 = vmatprep.subr.mxu0 0.0
    %123 = vmatpush1.msra.mxu0 0.0
    %124 = vmatprep.subr.mxu0 0.0
    %125 = vmatpush1.msra.mxu0 0.0
    %126 = vmatprep.subr.mxu0 0.0
    %127 = vmatpush1.msra.mxu0 0.0
    %128 = vmatprep.subr.mxu0 0.0
    %129 = vmatpush1.msra.mxu0 0.0
    %130 = vmatprep.subr.mxu0 0.0
    %131 = vmatpush1.msra.mxu0 0.0
    %132 = vmatprep.subr.mxu0 0.0
    %133 = vmatpush1.msra.mxu0 0.0
    %134 = vmatprep.subr.mxu0 0.0
    %135 = vmatpush1.msra.mxu0 0.0
    %136 = vmatprep.subr.mxu0 0.0
    %137 = vmatpush1.msra.mxu0 0.0
    %138 = vmatprep.subr.mxu0 0.0
    %139 = vmatpush1.msra.mxu0 0.0
    %140 = vmatprep.subr.mxu0 0.0
    %141 = vmatpush1.msra.mxu0 0.0
    %142 = vmatprep.subr.mxu0 0.0
    %143 = vmatpush1.msra.mxu0 0.0
    %144 = vmatprep.mubr.f32.mxu0 0.0
    %145 = vmatmul.mubr.f32.gmra.mrb[0].mxu0 %v78
    %v146 = vpop.f32.mrb[0].mxu0
    %v147 = vadd.f32 0.0, %v146
    %v148 = vpop.f32.mrb[0].mxu0
    %149 = vdwg.mxu0
    %v150 = vlaneseq
    %v151 = vshrl.u32 %v150, 7
    %v152 = vsub.s32 0, %v151
    %v153 = vrot.slane %v49, %v152
    %154 = vmatprep.subr.mxu0 0.0
    %155 = vmatpush1.msra.mxu0 %v33
    %156 = vmatprep.subr.mxu0 0.0
    %157 = vmatpush1.msra.mxu0 %v34
    %158 = vmatprep.subr.mxu0 0.0
    %159 = vmatpush1.msra.mxu0 %v35
    %160 = vmatprep.subr.mxu0 0.0
    %161 = vmatpush1.msra.mxu0 %v36
    %162 = vmatprep.subr.mxu0 0.0
    %163 = vmatpush1.msra.mxu0 %v37
    %164 = vmatprep.subr.mxu0 0.0
    %165 = vmatpush1.msra.mxu0 %v38
    %166 = vmatprep.subr.mxu0 0.0
    %167 = vmatpush1.msra.mxu0 %v39
    %168 = vmatprep.subr.mxu0 0.0
    %169 = vmatpush1.msra.mxu0 %v40
    %170 = vmatprep.subr.mxu0 0.0
    %171 = vmatpush1.msra.mxu0 %v41
    %172 = vmatprep.subr.mxu0 0.0
    %173 = vmatpush1.msra.mxu0 %v42
    %174 = vmatprep.subr.mxu0 0.0
    %175 = vmatpush1.msra.mxu0 %v43
    %176 = vmatprep.subr.mxu0 0.0
    %177 = vmatpush1.msra.mxu0 %v44
    %178 = vmatprep.subr.mxu0 0.0
    %179 = vmatpush1.msra.mxu0 %v45
    %180 = vmatprep.subr.mxu0 0.0
    %181 = vmatpush1.msra.mxu0 %v46
    %182 = vmatprep.subr.mxu0 0.0
    %183 = vmatpush1.msra.mxu0 %v47
    %184 = vmatprep.subr.mxu0 0.0
    %185 = vmatpush1.msra.mxu0 %v48
    %186 = vmatprep.subr.mxu0 0.0
    %187 = vmatpush1.msra.mxu0 0.0
    %188 = vmatprep.subr.mxu0 0.0
    %189 = vmatpush1.msra.mxu0 0.0
    %190 = vmatprep.subr.mxu0 0.0
    %191 = vmatpush1.msra.mxu0 0.0
    %192 = vmatprep.subr.mxu0 0.0
    %193 = vmatpush1.msra.mxu0 0.0
    %194 = vmatprep.subr.mxu0 0.0
    %195 = vmatpush1.msra.mxu0 0.0
    %196 = vmatprep.subr.mxu0 0.0
    %197 = vmatpush1.msra.mxu0 0.0
    %198 = vmatprep.subr.mxu0 0.0
    %199 = vmatpush1.msra.mxu0 0.0
    %200 = vmatprep.subr.mxu0 0.0
    %201 = vmatpush1.msra.mxu0 0.0
    %202 = vmatprep.subr.mxu0 0.0
    %203 = vmatpush1.msra.mxu0 0.0
    %204 = vmatprep.subr.mxu0 0.0
    %205 = vmatpush1.msra.mxu0 0.0
    %206 = vmatprep.subr.mxu0 0.0
    %207 = vmatpush1.msra.mxu0 0.0
    %208 = vmatprep.subr.mxu0 0.0
    %209 = vmatpush1.msra.mxu0 0.0
    %210 = vmatprep.subr.mxu0 0.0
    %211 = vmatpush1.msra.mxu0 0.0
    %212 = vmatprep.subr.mxu0 0.0
    %213 = vmatpush1.msra.mxu0 0.0
    %214 = vmatprep.subr.mxu0 0.0
    %215 = vmatpush1.msra.mxu0 0.0
    %216 = vmatprep.subr.mxu0 0.0
    %217 = vmatpush1.msra.mxu0 0.0
    %218 = vmatprep.mubr.f32.mxu0 0.0
    %219 = vmatmul.mubr.f32.gmra.mrb[0].mxu0 %v147
    %v220 = vpop.f32.mrb[0].mxu0
    %v221 = vadd.f32 %v153, %v220
    %v222 = vpop.f32.mrb[0].mxu0
    %223 = vdwg.mxu0
    %v224 = vmin.f32 %v221, 20.0
    %v225 = vmul.f32 %v224, 1.442695
    %v226 = vpow.pop %v225
    %v227 = vadd.f32 %v226, 2.0
    %v228 = vmul.f32 %v226, %v227
    %v229 = vadd.f32 %v228, 2.0
    %v230 = vrcp.pop %v229
    %v231 = vmul.f32 %v228, %v230
    %vm232 = vcmp.gt.f32.partialorder %v221, 20.0
    %v233 = vmul.f32 %v221, %v231
    %v234 = vsel %vm232, %v221, %v233
    %v235 = vlaneseq
    %v236 = vshrl.u32 %v235, 7
    %v237 = vsub.s32 0, %v236
    %v238 = vrot.slane %v66, %v237
    %239 = vmatprep.subr.mxu0 0.0
    %240 = vmatpush1.msra.mxu0 %v50
    %241 = vmatprep.subr.mxu0 0.0
    %242 = vmatpush1.msra.mxu0 %v51
    %243 = vmatprep.subr.mxu0 0.0
    %244 = vmatpush1.msra.mxu0 %v52
    %245 = vmatprep.subr.mxu0 0.0
    %246 = vmatpush1.msra.mxu0 %v53
    %247 = vmatprep.subr.mxu0 0.0
    %248 = vmatpush1.msra.mxu0 %v54
    %249 = vmatprep.subr.mxu0 0.0
    %250 = vmatpush1.msra.mxu0 %v55
    %251 = vmatprep.subr.mxu0 0.0
    %252 = vmatpush1.msra.mxu0 %v56
    %253 = vmatprep.subr.mxu0 0.0
    %254 = vmatpush1.msra.mxu0 %v57
    %255 = vmatprep.subr.mxu0 0.0
    %256 = vmatpush1.msra.mxu0 %v58
    %257 = vmatprep.subr.mxu0 0.0
    %258 = vmatpush1.msra.mxu0 %v59
    %259 = vmatprep.subr.mxu0 0.0
    %260 = vmatpush1.msra.mxu0 %v60
    %261 = vmatprep.subr.mxu0 0.0
    %262 = vmatpush1.msra.mxu0 %v61
    %263 = vmatprep.subr.mxu0 0.0
    %264 = vmatpush1.msra.mxu0 %v62
    %265 = vmatprep.subr.mxu0 0.0
    %266 = vmatpush1.msra.mxu0 %v63
    %267 = vmatprep.subr.mxu0 0.0
    %268 = vmatpush1.msra.mxu0 %v64
    %269 = vmatprep.subr.mxu0 0.0
    %270 = vmatpush1.msra.mxu0 %v65
    %271 = vmatprep.subr.mxu0 0.0
    %272 = vmatpush1.msra.mxu0 0.0
    %273 = vmatprep.subr.mxu0 0.0
    %274 = vmatpush1.msra.mxu0 0.0
    %275 = vmatprep.subr.mxu0 0.0
    %276 = vmatpush1.msra.mxu0 0.0
    %277 = vmatprep.subr.mxu0 0.0
    %278 = vmatpush1.msra.mxu0 0.0
    %279 = vmatprep.subr.mxu0 0.0
    %280 = vmatpush1.msra.mxu0 0.0
    %281 = vmatprep.subr.mxu0 0.0
    %282 = vmatpush1.msra.mxu0 0.0
    %283 = vmatprep.subr.mxu0 0.0
    %284 = vmatpush1.msra.mxu0 0.0
    %285 = vmatprep.subr.mxu0 0.0
    %286 = vmatpush1.msra.mxu0 0.0
    %287 = vmatprep.subr.mxu0 0.0
    %288 = vmatpush1.msra.mxu0 0.0
    %289 = vmatprep.subr.mxu0 0.0
    %290 = vmatpush1.msra.mxu0 0.0
    %291 = vmatprep.subr.mxu0 0.0
    %292 = vmatpush1.msra.mxu0 0.0
    %293 = vmatprep.subr.mxu0 0.0
    %294 = vmatpush1.msra.mxu0 0.0
    %295 = vmatprep.subr.mxu0 0.0
    %296 = vmatpush1.msra.mxu0 0.0
    %297 = vmatprep.subr.mxu0 0.0
    %298 = vmatpush1.msra.mxu0 0.0
    %299 = vmatprep.subr.mxu0 0.0
    %300 = vmatpush1.msra.mxu0 0.0
    %301 = vmatprep.subr.mxu0 0.0
    %302 = vmatpush1.msra.mxu0 0.0
    %303 = vmatprep.mubr.f32.mxu0 0.0
    %304 = vmatmul.mubr.f32.gmra.mrb[0].mxu0 %v234
    %v305 = vpop.f32.mrb[0].mxu0
    %v306 = vadd.f32 %v238, %v305
    %v307 = vpop.f32.mrb[0].mxu0
    %308 = vdwg.mxu0
    %309 = vst [vmem:[#allocation5] sm:$0xff] %v306
    // Predicated region
    $region14: #{tpu_custom_call.1} parent=1 // pred_check
      _
    $region15: #{tpu_custom_call.1} parent=1 // pred_check_branch
      %311 = sbr.rel (0) target = $region17
    $region16: #{tpu_custom_call.1} parent=1 // pred_region
      %s313 = ssub.s32 128, 128
      %314 = vsyncadd [#allocation4], %s313
      %s316 = sshll.u32 [#allocation5], 4
      %s317 = int_to_ptr.vmem [resolvable:$true] %s316
      %319 = dma.vmem_to_hbm [thread:$0]  %s317, 128, %s2, [#allocation4]
    $region17: #{tpu_custom_call.1} parent=1 // pred_fallthru
      _
    // Predicated region
    $region18: #{tpu_custom_call.1} parent=1 // pred_check
      _
    $region19: #{tpu_custom_call.1} parent=1 // pred_check_branch
      %321 = sbr.rel (0) target = $region21
    $region20: #{tpu_custom_call.1} parent=1 // pred_region
      %322 = dma.done [#allocation4], 128
    $region21: #{tpu_custom_call.1} parent=1 // pred_fallthru
      _
    %323 = vsyncpa [#allocation3], 1
    %324 = vsyncpa [#allocation4], 1

</llo_original>
